<compile_context>
chip_gen: v7x
topology: tpu7x:2x2x1
jax: 0.10.0
libtpu: 0.0.40
codegen_flags: <defaults>
</compile_context>

<pallas_src>
import functools
import math

import jax
import jax.numpy as jnp
from jax.experimental import pallas as pl
from jax.experimental.pallas import tpu as pltpu

LN_EPS = 1e-5  # torch.nn.LayerNorm default eps


def _layernorm(x):
    # LayerNorm(dim, elementwise_affine=False): population variance, eps=1e-5.
    mu = jnp.mean(x, axis=-1, keepdims=True)
    d = x - mu
    var = jnp.mean(d * d, axis=-1, keepdims=True)
    return d * jax.lax.rsqrt(var + LN_EPS)


# ---------------------------------------------------------------------------
# Fused kernel: anchors (Linear + LayerNorm) -> logits -> softmax -> sprite mix
# ---------------------------------------------------------------------------
def selection_kernel(x_ref, wa_ref, ba_ref, latT_ref, sprite_ref,
                     logit_ref, s_ref, *, inv_norm):
    # anchors: Linear(dim_enc -> dim_z) + LayerNorm (no affine)
    a = jnp.dot(x_ref[...], wa_ref[...], preferred_element_type=jnp.float32) + ba_ref[...]
    a = _layernorm(a)
    # logits = anchors @ latents^T / sqrt(dim_z)
    logits = jnp.dot(a, latT_ref[...], preferred_element_type=jnp.float32) * inv_norm
    logit_ref[...] = logits
    # softmax over the K+1 sprite axis; divide moved to the EUP reciprocal slot
    m = jnp.max(logits, axis=-1, keepdims=True)
    e = jnp.exp(logits - m)
    w = e * pl.reciprocal(jnp.sum(e, axis=-1, keepdims=True), approx=True)
    # S[r, :] = sum_n w[r, n] * sprite_flat[n, :]   (lane-dense 4*H*W-wide store)
    s_ref[...] = jnp.dot(w, sprite_ref[...], preferred_element_type=jnp.float32)


def _pick_tile(rows, dim_enc, n, chw, *, max_tile=1024, min_steps=4,
               vmem_budget=12 * 1024 * 1024):
    # Double-buffered f32 bytes per row across the pipelined blocks (x, logits, S).
    bytes_per_row = 2 * 4 * (dim_enc + n + chw)
    tile = min(max_tile, max(8, vmem_budget // max(bytes_per_row, 1)))
    # Keep >= min_steps grid steps so both v7x TensorCores get work and the
    # BlockSpec pipeline has iterations to overlap.
    if rows // max(tile, 1) < min_steps:
        tile = max(8, rows // min_steps)
    return max(8, (tile // 8) * 8)


# ---------------------------------------------------------------------------
# Wrapper (training-mode forward)
# ---------------------------------------------------------------------------
def selection_forward(x, latents, prototypes, masks, params, *, tile_rows=None):
    B, dim_enc, L = x.shape
    K, dim_sprites = latents.shape
    dim_z = params["Wa"].shape[1]
    N = K + 1                      # sprites + blank (module assumes K even -> N odd)
    H, W = prototypes.shape[-2:]
    CHW = 4 * H * W
    HI = jax.lax.Precision.HIGHEST

    # --- sprite latents path in plain JAX (tiny matmul; not worth a kernel launch)
    lat = _layernorm(jnp.dot(latents, params["Wl"], precision=HI) + params["bl"])
    lat_full = jnp.concatenate([lat, params["blank"]], axis=0)         # (N, dim_z)
    latT = lat_full.T.astype(jnp.float32)                              # (dim_z, N)

    # --- sprite stack: [prototypes|zeros ; masks|zeros] on channel dim, flattened
    proto_ext = jnp.concatenate([prototypes, jnp.zeros_like(prototypes[:1])], axis=0)
    masks_ext = jnp.concatenate([masks, jnp.zeros_like(masks[:1])], axis=0)
    sprite = jnp.concatenate([proto_ext, masks_ext], axis=1)           # (N, 4, H, W)
    sprite_flat = sprite.reshape(N, CHW).astype(jnp.float32)

    # --- L-major flattening: (B, C, L) -> (L, B, C) -> (L*B, C), row = l*B + b.
    # Kernel outputs then come out already (L, B, ...) ordered -> no big transposes.
    x_flat = jnp.transpose(x, (2, 0, 1)).reshape(L * B, dim_enc).astype(jnp.float32)

    rows = L * B
    tile = tile_rows if tile_rows is not None else _pick_tile(rows, dim_enc, N, CHW)
    rows_pad = pl.cdiv(rows, tile) * tile
    if rows_pad != rows:
        # Zero rows -> LayerNorm of the bias row; finite garbage, sliced off below.
        x_flat = jnp.pad(x_flat, ((0, rows_pad - rows), (0, 0)))

    kernel = functools.partial(selection_kernel, inv_norm=1.0 / math.sqrt(dim_z))
    logits_flat, s_flat = pl.pallas_call(
        kernel,
        out_shape=(jax.ShapeDtypeStruct((rows_pad, N), jnp.float32),
                   jax.ShapeDtypeStruct((rows_pad, CHW), jnp.float32)),
        grid=(rows_pad // tile,),
        in_specs=[pl.BlockSpec((tile, dim_enc), lambda i: (i, 0)),
                  pl.BlockSpec((dim_enc, dim_z), lambda i: (0, 0)),
                  pl.BlockSpec((1, dim_z), lambda i: (0, 0)),
                  pl.BlockSpec((dim_z, N), lambda i: (0, 0)),
                  pl.BlockSpec((N, CHW), lambda i: (0, 0))],
        out_specs=(pl.BlockSpec((tile, N), lambda i: (i, 0)),
                   pl.BlockSpec((tile, CHW), lambda i: (i, 0))),
        compiler_params=pltpu.CompilerParams(dimension_semantics=("parallel",)),
    )(x_flat, params["Wa"], params["ba"], latT, sprite_flat)

    logits_flat = logits_flat[:rows]
    s_flat = s_flat[:rows]

    # --- cheap glue on small arrays (width N); S needs no transpose at all.
    logits = logits_flat.reshape(L, B, N)                              # (L, B, N)
    probs = jax.nn.softmax(logits, axis=-1)                            # exact softmax
    weights = probs.transpose(1, 0, 2).reshape(B * L, N)               # module's 'w'
    pairs = probs[..., 0:N - 1:2] + probs[..., 1:N:2]                  # (L, B, (N-1)/2)
    log_probs = jnp.log(jnp.concatenate([pairs, probs[..., N - 1:N]], axis=-1))
    S = s_flat.reshape(L, B, 4, H, W)                                  # (L, B, 4, H, W)

    # TODO(synk): eval-mode one-hot 'selection' output not implemented (training-mode forward only).
    return {"w": weights, "logits": logits, "log_probs": log_probs, "S": S}


# ---------------------------------------------------------------------------
# Pure-JAX reference (mirrors the PyTorch code path) for a sanity check
# ---------------------------------------------------------------------------
def reference_forward(x, latents, prototypes, masks, params):
    HI = jax.lax.Precision.HIGHEST
    dim_z = params["Wa"].shape[1]
    norm = math.sqrt(dim_z)
    lat = _layernorm(jnp.dot(latents, params["Wl"], precision=HI) + params["bl"])
    lat = jnp.concatenate([lat, params["blank"]], axis=0).T
    B, C, L = x.shape
    xf = jnp.transpose(x, (0, 2, 1)).reshape(B * L, C)
    a = _layernorm(jnp.dot(xf, params["Wa"], precision=HI) + params["ba"])
    logits_flat = jnp.dot(a, lat, precision=HI) / norm
    weights = jax.nn.softmax(logits_flat, axis=-1)
    logits = logits_flat.reshape(B, L, -1).transpose(1, 0, 2)
    probs = jax.nn.softmax(logits, axis=2)
    N = probs.shape[-1]
    pairs = probs[..., 0:N - 1:2] + probs[..., 1:N:2]
    log_probs = jnp.log(jnp.concatenate([pairs, probs[..., N - 1:N]], axis=-1))
    proto_ext = jnp.concatenate([prototypes, jnp.zeros_like(prototypes[:1])], axis=0)
    masks_ext = jnp.concatenate([masks, jnp.zeros_like(masks[:1])], axis=0)
    sprite = jnp.concatenate([proto_ext, masks_ext], axis=1)
    S = (weights[..., None, None, None] * sprite[None]).sum(1)
    H, W = prototypes.shape[-2:]
    S = S.reshape(B, L, 4, H, W).transpose(1, 0, 2, 3, 4)
    return {"w": weights, "logits": logits, "log_probs": log_probs, "S": S}


if __name__ == "__main__":
    B, L = 2, 8
    dim_enc, dim_sprites = 32, 48
    dim_z = min(dim_enc, dim_sprites)          # 32
    K = 10                                     # K even -> K+1 odd (required by the pairing)
    H = W = 8

    key = jax.random.PRNGKey(0)
    ks = jax.random.split(key, 8)
    params = {
        "blank": jax.random.normal(ks[0], (1, dim_z), jnp.float32),
        "Wl": 0.1 * jax.random.normal(ks[1], (dim_sprites, dim_z), jnp.float32),
        "bl": 0.1 * jax.random.normal(ks[2], (1, dim_z), jnp.float32),
        "Wa": 0.1 * jax.random.normal(ks[3], (dim_enc, dim_z), jnp.float32),
        "ba": 0.1 * jax.random.normal(ks[4], (1, dim_z), jnp.float32),
    }
    x = jax.random.normal(ks[5], (B, dim_enc, L), jnp.float32)
    latents = jax.random.normal(ks[6], (K, dim_sprites), jnp.float32)
    sk0, sk1 = jax.random.split(ks[7])
    prototypes = jax.random.uniform(sk0, (K, 3, H, W), jnp.float32)
    masks = jax.random.uniform(sk1, (K, 1, H, W), jnp.float32)

    out = jax.jit(selection_forward)(x, latents, prototypes, masks, params)
    jax.block_until_ready(out)

    ref = reference_forward(x, latents, prototypes, masks, params)
    N = K + 1
    assert out["w"].shape == (B * L, N)
    assert out["logits"].shape == (L, B, N)
    assert out["log_probs"].shape == (L, B, (N + 1) // 2)
    assert out["S"].shape == (L, B, 4, H, W)
    # 2e-3 tolerance: leaves headroom for the EUP approx reciprocal in the softmax.
    for k in ("w", "logits", "log_probs", "S"):
        assert jnp.allclose(out[k], ref[k], atol=2e-3, rtol=2e-3), f"mismatch in {k}"

    print("KERNEL_OK")
</pallas_src>

<mosaic_0001>
module attributes {stable_mosaic.version = 11 : i64} {
  func.func @selection_kernel(%arg0: i32, %arg1: memref<8x32xf32, #tpu.memory_space<vmem>>, %arg2: memref<32x32xf32, #tpu.memory_space<vmem>>, %arg3: memref<1x32xf32, #tpu.memory_space<vmem>>, %arg4: memref<32x11xf32, #tpu.memory_space<vmem>>, %arg5: memref<11x256xf32, #tpu.memory_space<vmem>>, %arg6: memref<8x11xf32, #tpu.memory_space<vmem>>, %arg7: memref<8x256xf32, #tpu.memory_space<vmem>>) attributes {dimension_semantics = [#tpu.dimension_semantics<parallel>], iteration_bounds = array<i64: 2>, scalar_prefetch = 0 : i64, scratch_operands = 0 : i64, tpu.core_type = #tpu.core_type<tc>, window_params = [{transform_indices = @transform_0, window_bounds = array<i64: 8, 32>}, {pipeline_mode = #tpu.pipeline_mode<synchronous>, transform_indices = @transform_1, window_bounds = array<i64: 32, 32>}, {pipeline_mode = #tpu.pipeline_mode<synchronous>, transform_indices = @transform_2, window_bounds = array<i64: 1, 32>}, {pipeline_mode = #tpu.pipeline_mode<synchronous>, transform_indices = @transform_3, window_bounds = array<i64: 32, 11>}, {pipeline_mode = #tpu.pipeline_mode<synchronous>, transform_indices = @transform_4, window_bounds = array<i64: 11, 256>}, {transform_indices = @transform_5, window_bounds = array<i64: 8, 11>}, {transform_indices = @transform_6, window_bounds = array<i64: 8, 256>}]} {
    %c0 = arith.constant 0 : index
    %c0_0 = arith.constant 0 : index
    %0 = vector.load %arg1[%c0, %c0_0] : memref<8x32xf32, #tpu.memory_space<vmem>>, vector<8x32xf32>
    %c0_1 = arith.constant 0 : index
    %c0_2 = arith.constant 0 : index
    %1 = vector.load %arg2[%c0_1, %c0_2] : memref<32x32xf32, #tpu.memory_space<vmem>>, vector<32x32xf32>
    %cst = arith.constant dense<0.000000e+00> : vector<8x32xf32>
    %2 = tpu.matmul %0, %1, %cst {dimension_numbers = #tpu.dot_dimension_numbers<[1], [0], [0], [1], [0, 0, 1, 1], [], []>} : vector<8x32xf32>, vector<32x32xf32>, vector<8x32xf32> -> vector<8x32xf32>
    %c0_3 = arith.constant 0 : index
    %c0_4 = arith.constant 0 : index
    %3 = vector.load %arg3[%c0_3, %c0_4] : memref<1x32xf32, #tpu.memory_space<vmem>>, vector<1x32xf32>
    %4 = vector.broadcast %3 : vector<1x32xf32> to vector<8x32xf32>
    %5 = arith.addf %2, %4 : vector<8x32xf32>
    %cst_5 = arith.constant dense<0.000000e+00> : vector<8xf32>
    %6 = vector.multi_reduction <add>, %5, %cst_5 [1] : vector<8x32xf32> to vector<8xf32>
    %7 = vector.shape_cast %6 : vector<8xf32> to vector<8x1xf32>
    %cst_6 = arith.constant 3.200000e+01 : f32
    %8 = vector.broadcast %cst_6 : f32 to vector<8x1xf32>
    %9 = arith.divf %7, %8 : vector<8x1xf32>
    %10 = vector.broadcast %9 : vector<8x1xf32> to vector<8x32xf32>
    %11 = arith.subf %5, %10 : vector<8x32xf32>
    %12 = arith.mulf %11, %11 : vector<8x32xf32>
    %cst_7 = arith.constant dense<0.000000e+00> : vector<8xf32>
    %13 = vector.multi_reduction <add>, %12, %cst_7 [1] : vector<8x32xf32> to vector<8xf32>
    %14 = vector.shape_cast %13 : vector<8xf32> to vector<8x1xf32>
    %cst_8 = arith.constant 3.200000e+01 : f32
    %15 = vector.broadcast %cst_8 : f32 to vector<8x1xf32>
    %16 = arith.divf %14, %15 : vector<8x1xf32>
    %cst_9 = arith.constant 9.99999974E-6 : f32
    %17 = vector.broadcast %cst_9 : f32 to vector<8x1xf32>
    %18 = arith.addf %16, %17 : vector<8x1xf32>
    %19 = math.rsqrt %18 : vector<8x1xf32>
    %20 = vector.broadcast %19 : vector<8x1xf32> to vector<8x32xf32>
    %21 = arith.mulf %11, %20 : vector<8x32xf32>
    %c0_10 = arith.constant 0 : index
    %c0_11 = arith.constant 0 : index
    %22 = vector.load %arg4[%c0_10, %c0_11] : memref<32x11xf32, #tpu.memory_space<vmem>>, vector<32x11xf32>
    %cst_12 = arith.constant dense<0.000000e+00> : vector<8x11xf32>
    %23 = tpu.matmul %21, %22, %cst_12 {dimension_numbers = #tpu.dot_dimension_numbers<[1], [0], [0], [1], [0, 0, 1, 1], [], []>} : vector<8x32xf32>, vector<32x11xf32>, vector<8x11xf32> -> vector<8x11xf32>
    %cst_13 = arith.constant 0.176776692 : f32
    %24 = vector.broadcast %cst_13 : f32 to vector<8x11xf32>
    %25 = arith.mulf %23, %24 : vector<8x11xf32>
    %c0_14 = arith.constant 0 : index
    %c0_15 = arith.constant 0 : index
    %26 = vector.load %arg6[%c0_14, %c0_15] : memref<8x11xf32, #tpu.memory_space<vmem>>, vector<8x11xf32>
    tpu.vector_store %arg6[%c0_14, %c0_15], %25 {strides = array<i32>} : memref<8x11xf32, #tpu.memory_space<vmem>>, vector<8x11xf32>,
    %cst_16 = arith.constant dense<0xFF800000> : vector<8xf32>
    %27 = vector.multi_reduction <maximumf>, %25, %cst_16 [1] : vector<8x11xf32> to vector<8xf32>
    %28 = vector.shape_cast %27 : vector<8xf32> to vector<8x1xf32>
    %29 = vector.broadcast %28 : vector<8x1xf32> to vector<8x11xf32>
    %30 = arith.subf %25, %29 : vector<8x11xf32>
    %31 = math.exp %30 : vector<8x11xf32>
    %cst_17 = arith.constant dense<0.000000e+00> : vector<8xf32>
    %32 = vector.multi_reduction <add>, %31, %cst_17 [1] : vector<8x11xf32> to vector<8xf32>
    %33 = vector.shape_cast %32 : vector<8xf32> to vector<8x1xf32>
    %34 = tpu.reciprocal %33 {approx = true} : vector<8x1xf32> -> vector<8x1xf32>
    %35 = vector.broadcast %34 : vector<8x1xf32> to vector<8x11xf32>
    %36 = arith.mulf %31, %35 : vector<8x11xf32>
    %c0_18 = arith.constant 0 : index
    %c0_19 = arith.constant 0 : index
    %37 = vector.load %arg5[%c0_18, %c0_19] : memref<11x256xf32, #tpu.memory_space<vmem>>, vector<11x256xf32>
    %cst_20 = arith.constant dense<0.000000e+00> : vector<8x256xf32>
    %38 = tpu.matmul %36, %37, %cst_20 {dimension_numbers = #tpu.dot_dimension_numbers<[1], [0], [0], [1], [0, 0, 1, 1], [], []>} : vector<8x11xf32>, vector<11x256xf32>, vector<8x256xf32> -> vector<8x256xf32>
    %c0_21 = arith.constant 0 : index
    %c0_22 = arith.constant 0 : index
    %39 = vector.load %arg7[%c0_21, %c0_22] : memref<8x256xf32, #tpu.memory_space<vmem>>, vector<8x256xf32>
    tpu.vector_store %arg7[%c0_21, %c0_22], %38 {strides = array<i32>} : memref<8x256xf32, #tpu.memory_space<vmem>>, vector<8x256xf32>,
    return
  }
  func.func @transform_0(%arg0: i32) -> (i32, i32) {
    %c0_i32 = arith.constant 0 : i32
    %c0_i32_0 = arith.constant 0 : i32
    return %arg0, %c0_i32 : i32, i32
  }
  func.func @transform_1(%arg0: i32) -> (i32, i32) {
    %c0_i32 = arith.constant 0 : i32
    %c0_i32_0 = arith.constant 0 : i32
    %c0_i32_1 = arith.constant 0 : i32
    return %c0_i32, %c0_i32_0 : i32, i32
  }
  func.func @transform_2(%arg0: i32) -> (i32, i32) {
    %c0_i32 = arith.constant 0 : i32
    %c0_i32_0 = arith.constant 0 : i32
    %c0_i32_1 = arith.constant 0 : i32
    return %c0_i32, %c0_i32_0 : i32, i32
  }
  func.func @transform_3(%arg0: i32) -> (i32, i32) {
    %c0_i32 = arith.constant 0 : i32
    %c0_i32_0 = arith.constant 0 : i32
    %c0_i32_1 = arith.constant 0 : i32
    return %c0_i32, %c0_i32_0 : i32, i32
  }
  func.func @transform_4(%arg0: i32) -> (i32, i32) {
    %c0_i32 = arith.constant 0 : i32
    %c0_i32_0 = arith.constant 0 : i32
    %c0_i32_1 = arith.constant 0 : i32
    return %c0_i32, %c0_i32_0 : i32, i32
  }
  func.func @transform_5(%arg0: i32) -> (i32, i32) {
    %c0_i32 = arith.constant 0 : i32
    %c0_i32_0 = arith.constant 0 : i32
    return %arg0, %c0_i32 : i32, i32
  }
  func.func @transform_6(%arg0: i32) -> (i32, i32) {
    %c0_i32 = arith.constant 0 : i32
    %c0_i32_0 = arith.constant 0 : i32
    return %arg0, %c0_i32 : i32, i32
  }
}

</mosaic_0001>

<llo_original>
// kernel: sub.13
$region0: #{sub.13}
  %s0 = inlined_call_operand.vmem [shape: f32[16], index: 0, kind: input, shape index: {}]
  %s1 = inlined_call_operand.vmem [shape: f32[8,2], index: 1, kind: output, shape index: {}]
  $region1: #{sub.13} parent=0
    #allocation0 [shape = 'u8[4096]{0}', space=vmem, size = 0x1000, scoped, tag = 'scoped mem for input reshape']
    %s3 = sshllo.u32 0, 1
    %v4 = vld [vmem:[%s0] sm:%s3]
    %5 = vst [vmem:[#allocation0] sm:%s3] %v4
    %v6 = vld [vmem:[#allocation0] sm:$0x1]
    %vm7 = vcmask 15360
    %8 = vst.msk [vmem:[%s1] sm:$0x1] %vm7, %v6
    %v9 = vld [vmem:[#allocation0] sm:$0x1]
    %10 = vrot.lane.b32.xlu0 %v9, 126
    %v11 = vpop.permute.xlu0 %10
    %vm12 = vcmask 15360
    %s13 = scalar_lea.vmem %s1, 1
    %14 = vst.msk [vmem:[%s13] sm:$0x1] %vm12, %v11
    %v15 = vld [vmem:[#allocation0] sm:$0x1]
    %16 = vrot.lane.b32.xlu0 %v15, 124
    %v17 = vpop.permute.xlu0 %16
    %vm18 = vcmask 15360
    %s19 = scalar_lea.vmem %s1, 2
    %20 = vst.msk [vmem:[%s19] sm:$0x1] %vm18, %v17
    %v21 = vld [vmem:[#allocation0] sm:$0x1]
    %22 = vrot.lane.b32.xlu0 %v21, 122
    %v23 = vpop.permute.xlu0 %22
    %vm24 = vcmask 15360
    %s25 = scalar_lea.vmem %s1, 3
    %26 = vst.msk [vmem:[%s25] sm:$0x1] %vm24, %v23
    %v27 = vld [vmem:[#allocation0] sm:$0x1]
    %28 = vrot.lane.b32.xlu0 %v27, 120
    %v29 = vpop.permute.xlu0 %28
    %vm30 = vcmask 15360
    %s31 = scalar_lea.vmem %s1, 4
    %32 = vst.msk [vmem:[%s31] sm:$0x1] %vm30, %v29
    %v33 = vld [vmem:[#allocation0] sm:$0x1]
    %34 = vrot.lane.b32.xlu0 %v33, 118
    %v35 = vpop.permute.xlu0 %34
    %vm36 = vcmask 15360
    %s37 = scalar_lea.vmem %s1, 5
    %38 = vst.msk [vmem:[%s37] sm:$0x1] %vm36, %v35
    %v39 = vld [vmem:[#allocation0] sm:$0x1]
    %40 = vrot.lane.b32.xlu0 %v39, 116
    %v41 = vpop.permute.xlu0 %40
    %vm42 = vcmask 15360
    %s43 = scalar_lea.vmem %s1, 6
    %44 = vst.msk [vmem:[%s43] sm:$0x1] %vm42, %v41
    %v45 = vld [vmem:[#allocation0] sm:$0x1]
    %46 = vrot.lane.b32.xlu0 %v45, 114
    %v47 = vpop.permute.xlu0 %46
    %vm48 = vcmask 15360
    %s49 = scalar_lea.vmem %s1, 7
    %50 = vst.msk [vmem:[%s49] sm:$0x1] %vm48, %v47

// kernel: selection_forward.1
$region0: #{selection_forward.1}
  #allocation0 [shape = 'u32[]', space=smem, size = 0x4, offset = 0x4, fixed_abs, tag = 'smem constant byte address 0x4 - core index']
  #allocation1 [shape = 'u32[144,128]{1,0:T(1,128)}', space=vmem, size = 0x12000, scoped, tag = 'internal scratch']
  %s0 = inlined_call_operand.vmem [shape: f32[16,32], index: 0, kind: input, shape index: {}]
  %s1 = inlined_call_operand.vmem [shape: f32[32,32], index: 1, kind: input, shape index: {}]
  %s2 = inlined_call_operand.vmem [shape: f32[1,32], index: 2, kind: input, shape index: {}]
  %s3 = inlined_call_operand.vmem [shape: f32[32,11], index: 3, kind: input, shape index: {}]
  %s4 = inlined_call_operand.vmem [shape: f32[11,256], index: 4, kind: input, shape index: {}]
  %s5 = inlined_call_operand.vmem [shape: f32[16,11], index: 5, kind: output, shape index: {0}]
  %s6 = inlined_call_operand.vmem [shape: f32[16,256], index: 6, kind: output, shape index: {1}]
  %7 = xla_tuple %s5, %s6
  %s8 = sld [smem:[#allocation0]]
  $region61: #{selection_forward.1} parent=0
    _
  %s10 = ssub.s32 1, %s8
  %s11 = scalar_select 0, %s10, %s8
  loop: start=0, step=1, limit=4
  $region2: #{selection_forward.1} parent=0 // loop_pre_header
    _
  $region3: #{selection_forward.1} parent=0 // loop_header
    %s13 = sphi 0, %s17
    %p14 = scmp.ge.s32.totalorder %s13, 4
    %s23 = sphi 0, %s25
    %s26 = sphi 0, %s23
    %s27 = sphi 0, %s26
    %s43 = sphi 0, %s27
    %s47 = sphi 0, %s47
    %s49 = sphi 0, %s47
    %s50 = sphi 0, %s49
    %s64 = sphi 0, %s50
    %s68 = sphi 0, %s68
    %s70 = sphi 0, %s68
    %s71 = sphi 0, %s70
    %s85 = sphi 0, %s71
    %s89 = sphi 0, %s89
    %s91 = sphi 0, %s89
    %s92 = sphi 0, %s91
    %s106 = sphi 0, %s92
    %s110 = sphi 0, %s110
    %s112 = sphi 0, %s110
    %s113 = sphi 0, %s112
    %s127 = sphi 0, %s113
    %s133 = sphi 0, %s135
    %s136 = sphi 0, %s133
    %s137 = sphi 0, %s136
    %s153 = sphi 0, %s137
    %s159 = sphi 0, %s161
    %s162 = sphi 0, %s159
    %s163 = sphi 0, %s162
    %s179 = sphi 0, %s163
  $region4: #{selection_forward.1} parent=0 // loop_header_branch
    %16 = sbr.rel (%p14) target = $region8
  $region5: #{selection_forward.1} parent=0 // loop_body
    %s18 = ssub.s32 %s13, 1
    %s19 = ssub.s32 %s13, 2
    %s20 = sadd.s32 %s13, 1
    %s21 = ssub.s32 %s13, %s20
    %p22 = scmp.eq.s32.totalorder %s21, 0
    %s24 = sadd.s32 %s23, 1
    %s25 = scalar_select %p22, %s23, %s24
    %p28 = pneg %p22
    %p29 = scmp.eq.s32.totalorder %s13, 1
    %p30 = por %p28, %p29
    %p31 = scmp.ne.s32.totalorder %s23, %s26
    %p32 = scmp.eq.s32.totalorder %s13, 0
    %p33 = por %p31, %p32
    %p34 = scmp.ne.s32.totalorder %s23, %s26
    %p35 = scmp.eq.s32.totalorder %s18, 1
    %p36 = por %p34, %p35
    %p37 = scmp.ne.s32.totalorder %s26, %s27
    %p38 = scmp.eq.s32.totalorder %s18, 0
    %p39 = por %p37, %p38
    %p40 = scmp.ne.s32.totalorder %s26, %s27
    %p41 = scmp.eq.s32.totalorder %s19, 1
    %p42 = por %p40, %p41
    %p44 = scmp.ne.s32.totalorder %s27, %s43
    %p45 = scmp.eq.s32.totalorder %s19, 0
    %p46 = por %p44, %p45
    %s48 = sadd.s32 %s47, 1
    %p51 = scmp.eq.s32.totalorder %s13, 1
    %p52 = scmp.ne.s32.totalorder %s47, %s49
    %p53 = scmp.eq.s32.totalorder %s13, 0
    %p54 = por %p52, %p53
    %p55 = scmp.ne.s32.totalorder %s47, %s49
    %p56 = scmp.eq.s32.totalorder %s18, 1
    %p57 = por %p55, %p56
    %p58 = scmp.ne.s32.totalorder %s49, %s50
    %p59 = scmp.eq.s32.totalorder %s18, 0
    %p60 = por %p58, %p59
    %p61 = scmp.ne.s32.totalorder %s49, %s50
    %p62 = scmp.eq.s32.totalorder %s19, 1
    %p63 = por %p61, %p62
    %p65 = scmp.ne.s32.totalorder %s50, %s64
    %p66 = scmp.eq.s32.totalorder %s19, 0
    %p67 = por %p65, %p66
    %s69 = sadd.s32 %s68, 1
    %p72 = scmp.eq.s32.totalorder %s13, 1
    %p73 = scmp.ne.s32.totalorder %s68, %s70
    %p74 = scmp.eq.s32.totalorder %s13, 0
    %p75 = por %p73, %p74
    %p76 = scmp.ne.s32.totalorder %s68, %s70
    %p77 = scmp.eq.s32.totalorder %s18, 1
    %p78 = por %p76, %p77
    %p79 = scmp.ne.s32.totalorder %s70, %s71
    %p80 = scmp.eq.s32.totalorder %s18, 0
    %p81 = por %p79, %p80
    %p82 = scmp.ne.s32.totalorder %s70, %s71
    %p83 = scmp.eq.s32.totalorder %s19, 1
    %p84 = por %p82, %p83
    %p86 = scmp.ne.s32.totalorder %s71, %s85
    %p87 = scmp.eq.s32.totalorder %s19, 0
    %p88 = por %p86, %p87
    %s90 = sadd.s32 %s89, 1
    %p93 = scmp.eq.s32.totalorder %s13, 1
    %p94 = scmp.ne.s32.totalorder %s89, %s91
    %p95 = scmp.eq.s32.totalorder %s13, 0
    %p96 = por %p94, %p95
    %p97 = scmp.ne.s32.totalorder %s89, %s91
    %p98 = scmp.eq.s32.totalorder %s18, 1
    %p99 = por %p97, %p98
    %p100 = scmp.ne.s32.totalorder %s91, %s92
    %p101 = scmp.eq.s32.totalorder %s18, 0
    %p102 = por %p100, %p101
    %p103 = scmp.ne.s32.totalorder %s91, %s92
    %p104 = scmp.eq.s32.totalorder %s19, 1
    %p105 = por %p103, %p104
    %p107 = scmp.ne.s32.totalorder %s92, %s106
    %p108 = scmp.eq.s32.totalorder %s19, 0
    %p109 = por %p107, %p108
    %s111 = sadd.s32 %s110, 1
    %p114 = scmp.eq.s32.totalorder %s13, 1
    %p115 = scmp.ne.s32.totalorder %s110, %s112
    %p116 = scmp.eq.s32.totalorder %s13, 0
    %p117 = por %p115, %p116
    %p118 = scmp.ne.s32.totalorder %s110, %s112
    %p119 = scmp.eq.s32.totalorder %s18, 1
    %p120 = por %p118, %p119
    %p121 = scmp.ne.s32.totalorder %s112, %s113
    %p122 = scmp.eq.s32.totalorder %s18, 0
    %p123 = por %p121, %p122
    %p124 = scmp.ne.s32.totalorder %s112, %s113
    %p125 = scmp.eq.s32.totalorder %s19, 1
    %p126 = por %p124, %p125
    %p128 = scmp.ne.s32.totalorder %s113, %s127
    %p129 = scmp.eq.s32.totalorder %s19, 0
    %p130 = por %p128, %p129
    %s131 = ssub.s32 %s13, %s20
    %p132 = scmp.eq.s32.totalorder %s131, 0
    %s134 = sadd.s32 %s133, 1
    %s135 = scalar_select %p132, %s133, %s134
    %p138 = pneg %p132
    %p139 = scmp.eq.s32.totalorder %s13, 1
    %p140 = por %p138, %p139
    %p141 = scmp.ne.s32.totalorder %s133, %s136
    %p142 = scmp.eq.s32.totalorder %s13, 0
    %p143 = por %p141, %p142
    %p144 = scmp.ne.s32.totalorder %s133, %s136
    %p145 = scmp.eq.s32.totalorder %s18, 1
    %p146 = por %p144, %p145
    %p147 = scmp.ne.s32.totalorder %s136, %s137
    %p148 = scmp.eq.s32.totalorder %s18, 0
    %p149 = por %p147, %p148
    %p150 = scmp.ne.s32.totalorder %s136, %s137
    %p151 = scmp.eq.s32.totalorder %s19, 1
    %p152 = por %p150, %p151
    %p154 = scmp.ne.s32.totalorder %s137, %s153
    %p155 = scmp.eq.s32.totalorder %s19, 0
    %p156 = por %p154, %p155
    %s157 = ssub.s32 %s13, %s20
    %p158 = scmp.eq.s32.totalorder %s157, 0
    %s160 = sadd.s32 %s159, 1
    %s161 = scalar_select %p158, %s159, %s160
    %p164 = pneg %p158
    %p165 = scmp.eq.s32.totalorder %s13, 1
    %p166 = por %p164, %p165
    %p167 = scmp.ne.s32.totalorder %s159, %s162
    %p168 = scmp.eq.s32.totalorder %s13, 0
    %p169 = por %p167, %p168
    %p170 = scmp.ne.s32.totalorder %s159, %s162
    %p171 = scmp.eq.s32.totalorder %s18, 1
    %p172 = por %p170, %p171
    %p173 = scmp.ne.s32.totalorder %s162, %s163
    %p174 = scmp.eq.s32.totalorder %s18, 0
    %p175 = por %p173, %p174
    %p176 = scmp.ne.s32.totalorder %s162, %s163
    %p177 = scmp.eq.s32.totalorder %s19, 1
    %p178 = por %p176, %p177
    %p180 = scmp.ne.s32.totalorder %s163, %s179
    %p181 = scmp.eq.s32.totalorder %s19, 0
    %p182 = por %p180, %p181
    %p183 = scmp.le.s32.totalorder 1, %s13
    %p184 = scmp.lt.s32.totalorder %s13, 3
    %p185 = pnand %p183, %p184
    %p186 = pneg %p185
    // Predicated region
    $region9: #{selection_forward.1} parent=5 // pred_check
      _
    $region10: #{selection_forward.1} parent=5 // pred_check_branch
      %188 = sbr.rel (%p185) target = $region12
    $region11: #{selection_forward.1} parent=5 // pred_region
      %s189 = ssub.s32 %s13, 1
      // Predicated region
      $region13: #{selection_forward.1} parent=11 // pred_check
        %p190 = pneg %p60
      $region14: #{selection_forward.1} parent=11 // pred_check_branch
        %192 = sbr.rel (%p190) target = $region16
      $region15: #{selection_forward.1} parent=11 // pred_region
        _
      $region16: #{selection_forward.1} parent=11 // pred_fallthru
        _
      // Predicated region
      $region17: #{selection_forward.1} parent=11 // pred_check
        %p193 = pneg %p81
      $region18: #{selection_forward.1} parent=11 // pred_check_branch
        %195 = sbr.rel (%p193) target = $region20
      $region19: #{selection_forward.1} parent=11 // pred_region
        _
      $region20: #{selection_forward.1} parent=11 // pred_fallthru
        _
      // Predicated region
      $region21: #{selection_forward.1} parent=11 // pred_check
        %p196 = pneg %p102
      $region22: #{selection_forward.1} parent=11 // pred_check_branch
        %198 = sbr.rel (%p196) target = $region24
      $region23: #{selection_forward.1} parent=11 // pred_region
        _
      $region24: #{selection_forward.1} parent=11 // pred_fallthru
        _
      // Predicated region
      $region25: #{selection_forward.1} parent=11 // pred_check
        %p199 = pneg %p123
      $region26: #{selection_forward.1} parent=11 // pred_check_branch
        %201 = sbr.rel (%p199) target = $region28
      $region27: #{selection_forward.1} parent=11 // pred_region
        _
      $region28: #{selection_forward.1} parent=11 // pred_fallthru
        _
    $region12: #{selection_forward.1} parent=5 // pred_fallthru
      _
    %p202 = scmp.lt.s32.totalorder %s13, 2
    // Predicated region
    $region29: #{selection_forward.1} parent=5 // pred_check
      %p203 = pneg %p202
    $region30: #{selection_forward.1} parent=5 // pred_check_branch
      %205 = sbr.rel (%p203) target = $region32
    $region31: #{selection_forward.1} parent=5 // pred_region
      // Predicated region
      $region33: #{selection_forward.1} parent=31 // pred_check
        %p206 = pneg %p33
      $region34: #{selection_forward.1} parent=31 // pred_check_branch
        %208 = sbr.rel (%p206) target = $region36
      $region35: #{selection_forward.1} parent=31 // pred_region
        %p209 = scmp.lt.s32.totalorder %s13, 1
        %s210 = scalar_select %p209, %s13, 1
        %s211 = smul.addr %s210, 8
        %s212 = scalar_lea.vmem %s0, %s211
      $region36: #{selection_forward.1} parent=31 // pred_fallthru
        _
    $region32: #{selection_forward.1} parent=5 // pred_fallthru
      _
    %p213 = scmp.le.s32.totalorder 1, %s13
    %p214 = scmp.lt.s32.totalorder %s13, 3
    %p215 = pnand %p213, %p214
    %p216 = pneg %p215
    // Predicated region
    $region37: #{selection_forward.1} parent=5 // pred_check
      _
    $region38: #{selection_forward.1} parent=5 // pred_check_branch
      %218 = sbr.rel (%p215) target = $region40
    $region39: #{selection_forward.1} parent=5 // pred_region
      %s219 = ssub.s32 %s13, 1
      %p220 = scmp.lt.s32.totalorder %s18, 1
      %s221 = scalar_select %p220, %s18, 1
      %s222 = smul.addr %s221, 8
      %s223 = scalar_lea.vmem %s0, %s222
      %p224 = pneg %p39
      %p225 = pneg %p36
      %p226 = pneg %p60
      %p227 = pneg %p57
      %p228 = pneg %p81
      %p229 = pneg %p78
      %p230 = pneg %p102
      %p231 = pneg %p99
      %p232 = pneg %p123
      %p233 = pneg %p120
      %p234 = pneg %p149
      %p235 = pneg %p146
      %p236 = scmp.lt.s32.totalorder %s18, 1
      %s237 = scalar_select %p236, %s18, 1
      %s238 = smul.addr %s237, 8
      %s239 = scalar_lea.vmem %s5, %s238
      %p240 = pneg %p175
      %p241 = pneg %p172
      %p242 = scmp.lt.s32.totalorder %s18, 1
      %s243 = scalar_select %p242, %s18, 1
      %s244 = smul.addr %s243, 2
      %s245 = smul.addr %s244, 8
      %s246 = scalar_lea.vmem %s6, %s245
      %p247 = scmp.lt.s32.totalorder %s18, 1
      %s248 = scalar_select %p247, %s18, 1
      %s249 = smul.addr %s248, 8
      %s250 = scalar_lea.vmem %s0, %s249
      %p251 = scmp.lt.s32.totalorder %s18, 1
      %s252 = scalar_select %p251, %s18, 1
      %s253 = smul.addr %s252, 8
      %s254 = scalar_lea.vmem %s5, %s253
      %p255 = scmp.lt.s32.totalorder %s18, 1
      %s256 = scalar_select %p255, %s18, 1
      %s257 = smul.addr %s256, 2
      %s258 = smul.addr %s257, 8
      %s259 = scalar_lea.vmem %s6, %s258
      %v260 = vld [vmem:[%s250] sm:$0xff]
      %v261 = vld [vmem:[%s1] sm:$0xff]
      %v262 = vld [vmem:[%s1 + $0x8] sm:$0xff]
      %v263 = vld [vmem:[%s1 + $0x10] sm:$0xff]
      %v264 = vld [vmem:[%s1 + $0x18] sm:$0xff]
      %v265 = vld [vmem:[%s2] sm:$0x1]
      %v267 = vlaneseq
      %v268 = vshrl.u32 %v267, 7
      %v269 = vsub.s32 0, %v268
      %v270 = vrot.slane %v265, %v269
      %vm272 = vcmask 261120
      %v274 = vsel %vm272, %v260, 0
      %276 = vmatprep.subr.mxu0 0.0
      %277 = vmatpush1.msra.mxu0 %v261
      %278 = vmatprep.subr.mxu0 0.0
      %279 = vmatpush1.msra.mxu0 %v262
      %280 = vmatprep.subr.mxu0 0.0
      %281 = vmatpush1.msra.mxu0 %v263
      %282 = vmatprep.subr.mxu0 0.0
      %283 = vmatpush1.msra.mxu0 %v264
      %284 = vmatprep.subr.mxu0 0.0
      %285 = vmatpush1.msra.mxu0 0.0
      %286 = vmatprep.subr.mxu0 0.0
      %287 = vmatpush1.msra.mxu0 0.0
      %288 = vmatprep.subr.mxu0 0.0
      %289 = vmatpush1.msra.mxu0 0.0
      %290 = vmatprep.subr.mxu0 0.0
      %291 = vmatpush1.msra.mxu0 0.0
      %292 = vmatprep.subr.mxu0 0.0
      %293 = vmatpush1.msra.mxu0 0.0
      %294 = vmatprep.subr.mxu0 0.0
      %295 = vmatpush1.msra.mxu0 0.0
      %296 = vmatprep.subr.mxu0 0.0
      %297 = vmatpush1.msra.mxu0 0.0
      %298 = vmatprep.subr.mxu0 0.0
      %299 = vmatpush1.msra.mxu0 0.0
      %300 = vmatprep.subr.mxu0 0.0
      %301 = vmatpush1.msra.mxu0 0.0
      %302 = vmatprep.subr.mxu0 0.0
      %303 = vmatpush1.msra.mxu0 0.0
      %304 = vmatprep.subr.mxu0 0.0
      %305 = vmatpush1.msra.mxu0 0.0
      %306 = vmatprep.subr.mxu0 0.0
      %307 = vmatpush1.msra.mxu0 0.0
      %308 = vmatprep.subr.mxu0 0.0
      %309 = vmatpush1.msra.mxu0 0.0
      %310 = vmatprep.subr.mxu0 0.0
      %311 = vmatpush1.msra.mxu0 0.0
      %312 = vmatprep.subr.mxu0 0.0
      %313 = vmatpush1.msra.mxu0 0.0
      %314 = vmatprep.subr.mxu0 0.0
      %315 = vmatpush1.msra.mxu0 0.0
      %316 = vmatprep.subr.mxu0 0.0
      %317 = vmatpush1.msra.mxu0 0.0
      %318 = vmatprep.subr.mxu0 0.0
      %319 = vmatpush1.msra.mxu0 0.0
      %320 = vmatprep.subr.mxu0 0.0
      %321 = vmatpush1.msra.mxu0 0.0
      %322 = vmatprep.subr.mxu0 0.0
      %323 = vmatpush1.msra.mxu0 0.0
      %324 = vmatprep.subr.mxu0 0.0
      %325 = vmatpush1.msra.mxu0 0.0
      %326 = vmatprep.subr.mxu0 0.0
      %327 = vmatpush1.msra.mxu0 0.0
      %328 = vmatprep.subr.mxu0 0.0
      %329 = vmatpush1.msra.mxu0 0.0
      %330 = vmatprep.subr.mxu0 0.0
      %331 = vmatpush1.msra.mxu0 0.0
      %332 = vmatprep.subr.mxu0 0.0
      %333 = vmatpush1.msra.mxu0 0.0
      %334 = vmatprep.subr.mxu0 0.0
      %335 = vmatpush1.msra.mxu0 0.0
      %336 = vmatprep.subr.mxu0 0.0
      %337 = vmatpush1.msra.mxu0 0.0
      %338 = vmatprep.subr.mxu0 0.0
      %339 = vmatpush1.msra.mxu0 0.0
      %340 = vmatprep.mubr.f32.mxu0 0.0
      %341 = vmatmul.mubr.f32.gmra.mrb[0].mxu0 %v274
      %v342 = vpop.f32.mrb[0].mxu0
      %v343 = vadd.f32 %v270, %v342
      %v344 = vpop.f32.mrb[0].mxu0
      %345 = vdwg.mxu0
      %v346 = vsel %vm272, %v343, 0.0
      %347 = vadd.xlane.f32.xlu0 %v346
      %v348 = vpop.xlane.xlu0 %347
      %v349 = vrcp.pop 32.0
      %v350 = vmul.f32 %v348, %v349
      %v351 = vsub.f32 %v343, %v350
      %v352 = vmul.f32 %v351, %v351
      %v353 = vsel %vm272, %v352, 0.0
      %354 = vadd.xlane.f32.xlu0 %v353
      %v355 = vpop.xlane.xlu0 %354
      %v356 = vmul.f32 %v355, %v349
      %v357 = vadd.f32 %v356, 1e-05
      %v358 = vrsqrt.pop %v357
      %v359 = vmul.f32 %v351, %v358
      %v360 = vld [vmem:[%s3] sm:$0xff]
      %v361 = vld [vmem:[%s3 + $0x8] sm:$0xff]
      %v362 = vld [vmem:[%s3 + $0x10] sm:$0xff]
      %v363 = vld [vmem:[%s3 + $0x18] sm:$0xff]
      %v365 = vsel %vm272, %v359, 0
      %367 = vmatprep.subr.mxu0 0.0
      %368 = vmatpush1.msra.mxu0 %v360
      %369 = vmatprep.subr.mxu0 0.0
      %370 = vmatpush1.msra.mxu0 %v361
      %371 = vmatprep.subr.mxu0 0.0
      %372 = vmatpush1.msra.mxu0 %v362
      %373 = vmatprep.subr.mxu0 0.0
      %374 = vmatpush1.msra.mxu0 %v363
      %375 = vmatprep.subr.mxu0 0.0
      %376 = vmatpush1.msra.mxu0 0.0
      %377 = vmatprep.subr.mxu0 0.0
      %378 = vmatpush1.msra.mxu0 0.0
      %379 = vmatprep.subr.mxu0 0.0
      %380 = vmatpush1.msra.mxu0 0.0
      %381 = vmatprep.subr.mxu0 0.0
      %382 = vmatpush1.msra.mxu0 0.0
      %383 = vmatprep.subr.mxu0 0.0
      %384 = vmatpush1.msra.mxu0 0.0
      %385 = vmatprep.subr.mxu0 0.0
      %386 = vmatpush1.msra.mxu0 0.0
      %387 = vmatprep.subr.mxu0 0.0
      %388 = vmatpush1.msra.mxu0 0.0
      %389 = vmatprep.subr.mxu0 0.0
      %390 = vmatpush1.msra.mxu0 0.0
      %391 = vmatprep.subr.mxu0 0.0
      %392 = vmatpush1.msra.mxu0 0.0
      %393 = vmatprep.subr.mxu0 0.0
      %394 = vmatpush1.msra.mxu0 0.0
      %395 = vmatprep.subr.mxu0 0.0
      %396 = vmatpush1.msra.mxu0 0.0
      %397 = vmatprep.subr.mxu0 0.0
      %398 = vmatpush1.msra.mxu0 0.0
      %399 = vmatprep.subr.mxu0 0.0
      %400 = vmatpush1.msra.mxu0 0.0
      %401 = vmatprep.subr.mxu0 0.0
      %402 = vmatpush1.msra.mxu0 0.0
      %403 = vmatprep.subr.mxu0 0.0
      %404 = vmatpush1.msra.mxu0 0.0
      %405 = vmatprep.subr.mxu0 0.0
      %406 = vmatpush1.msra.mxu0 0.0
      %407 = vmatprep.subr.mxu0 0.0
      %408 = vmatpush1.msra.mxu0 0.0
      %409 = vmatprep.subr.mxu0 0.0
      %410 = vmatpush1.msra.mxu0 0.0
      %411 = vmatprep.subr.mxu0 0.0
      %412 = vmatpush1.msra.mxu0 0.0
      %413 = vmatprep.subr.mxu0 0.0
      %414 = vmatpush1.msra.mxu0 0.0
      %415 = vmatprep.subr.mxu0 0.0
      %416 = vmatpush1.msra.mxu0 0.0
      %417 = vmatprep.subr.mxu0 0.0
      %418 = vmatpush1.msra.mxu0 0.0
      %419 = vmatprep.subr.mxu0 0.0
      %420 = vmatpush1.msra.mxu0 0.0
      %421 = vmatprep.subr.mxu0 0.0
      %422 = vmatpush1.msra.mxu0 0.0
      %423 = vmatprep.subr.mxu0 0.0
      %424 = vmatpush1.msra.mxu0 0.0
      %425 = vmatprep.subr.mxu0 0.0
      %426 = vmatpush1.msra.mxu0 0.0
      %427 = vmatprep.subr.mxu0 0.0
      %428 = vmatpush1.msra.mxu0 0.0
      %429 = vmatprep.subr.mxu0 0.0
      %430 = vmatpush1.msra.mxu0 0.0
      %431 = vmatprep.mubr.f32.mxu0 0.0
      %432 = vmatmul.mubr.f32.gmra.mrb[0].mxu0 %v365
      %v433 = vpop.f32.mrb[0].mxu0
      %v434 = vadd.f32 0.0, %v433
      %v435 = vpop.f32.mrb[0].mxu0
      %436 = vdwg.mxu0
      %v437 = vmul.f32 %v434, 0.17677669
      %vm438 = vcmask 89088
      %439 = vst.msk [vmem:[%s254] sm:$0xff] %vm438, %v437
      %v440 = vsel %vm438, %v437, -inf
      %441 = vmax.xlane.f32.xlu0 %v440
      %v442 = vpop.xlane.xlu0 %441
      %v443 = vsub.f32 %v437, %v442
      %v444 = vmul.f32 %v443, 1.442695
      %v445 = vpow.pop %v444
      %v446 = vsel %vm438, %v445, 0.0
      %447 = vadd.xlane.f32.xlu0 %v446
      %v448 = vpop.xlane.xlu0 %447
      %v449 = vrcp.pop %v448
      %v450 = vmul.f32 %v445, %v449
      %v451 = vld [vmem:[%s4] sm:$0xff]
      %v452 = vld [vmem:[%s4 + $0x8] sm:$0xff]
      %v453 = vld [vmem:[%s4 + $0x10] sm:$0x7]
      %v454 = vld [vmem:[%s4 + $0x18] sm:$0x7]
      %v456 = vsel %vm438, %v450, 0
      %vm458 = vcmask 1042432
      %v460 = vsel %vm458, %v453, 0
      %v463 = vsel %vm458, %v454, 0
      %465 = vmatprep.subr.mxu0 %v452
      %466 = vmatpush1.msra.mxu0 %v451
      %467 = vmatprep.subr.mxu0 %v463
      %468 = vmatpush1.msra.mxu0 %v460
      %469 = vmatprep.subr.mxu0 0.0
      %470 = vmatpush1.msra.mxu0 0.0
      %471 = vmatprep.subr.mxu0 0.0
      %472 = vmatpush1.msra.mxu0 0.0
      %473 = vmatprep.subr.mxu0 0.0
      %474 = vmatpush1.msra.mxu0 0.0
      %475 = vmatprep.subr.mxu0 0.0
      %476 = vmatpush1.msra.mxu0 0.0
      %477 = vmatprep.subr.mxu0 0.0
      %478 = vmatpush1.msra.mxu0 0.0
      %479 = vmatprep.subr.mxu0 0.0
      %480 = vmatpush1.msra.mxu0 0.0
      %481 = vmatprep.subr.mxu0 0.0
      %482 = vmatpush1.msra.mxu0 0.0
      %483 = vmatprep.subr.mxu0 0.0
      %484 = vmatpush1.msra.mxu0 0.0
      %485 = vmatprep.subr.mxu0 0.0
      %486 = vmatpush1.msra.mxu0 0.0
      %487 = vmatprep.subr.mxu0 0.0
      %488 = vmatpush1.msra.mxu0 0.0
      %489 = vmatprep.subr.mxu0 0.0
      %490 = vmatpush1.msra.mxu0 0.0
      %491 = vmatprep.subr.mxu0 0.0
      %492 = vmatpush1.msra.mxu0 0.0
      %493 = vmatprep.subr.mxu0 0.0
      %494 = vmatpush1.msra.mxu0 0.0
      %495 = vmatprep.subr.mxu0 0.0
      %496 = vmatpush1.msra.mxu0 0.0
      %497 = vmatprep.subr.mxu0 0.0
      %498 = vmatpush1.msra.mxu0 0.0
      %499 = vmatprep.subr.mxu0 0.0
      %500 = vmatpush1.msra.mxu0 0.0
      %501 = vmatprep.subr.mxu0 0.0
      %502 = vmatpush1.msra.mxu0 0.0
      %503 = vmatprep.subr.mxu0 0.0
      %504 = vmatpush1.msra.mxu0 0.0
      %505 = vmatprep.subr.mxu0 0.0
      %506 = vmatpush1.msra.mxu0 0.0
      %507 = vmatprep.subr.mxu0 0.0
      %508 = vmatpush1.msra.mxu0 0.0
      %509 = vmatprep.subr.mxu0 0.0
      %510 = vmatpush1.msra.mxu0 0.0
      %511 = vmatprep.subr.mxu0 0.0
      %512 = vmatpush1.msra.mxu0 0.0
      %513 = vmatprep.subr.mxu0 0.0
      %514 = vmatpush1.msra.mxu0 0.0
      %515 = vmatprep.subr.mxu0 0.0
      %516 = vmatpush1.msra.mxu0 0.0
      %517 = vmatprep.subr.mxu0 0.0
      %518 = vmatpush1.msra.mxu0 0.0
      %519 = vmatprep.subr.mxu0 0.0
      %520 = vmatpush1.msra.mxu0 0.0
      %521 = vmatprep.subr.mxu0 0.0
      %522 = vmatpush1.msra.mxu0 0.0
      %523 = vmatprep.subr.mxu0 0.0
      %524 = vmatpush1.msra.mxu0 0.0
      %525 = vmatprep.subr.mxu0 0.0
      %526 = vmatpush1.msra.mxu0 0.0
      %527 = vmatprep.subr.mxu0 0.0
      %528 = vmatpush1.msra.mxu0 0.0
      %529 = vmatprep.mubr.f32.mxu0 0.0
      %530 = vmatmul.mubr.f32.gmra.mrb[0].mxu0 %v456
      %v531 = vpop.f32.mrb[0].mxu0
      %v532 = vadd.f32 0.0, %v531
      %v533 = vpop.f32.mrb[0].mxu0
      %v534 = vadd.f32 0.0, %v533
      %535 = vdwg.mxu0
      %536 = vst [vmem:[%s259] sm:$0xff] %v532
      %537 = vst [vmem:[%s259 + $0x8] sm:$0xff] %v534
      %p538 = scmp.lt.s32.totalorder %s18, 1
      %s539 = scalar_select %p538, %s18, 1
      %s540 = smul.addr %s539, 8
      %s541 = scalar_lea.vmem %s5, %s540
      %p542 = scmp.lt.s32.totalorder %s18, 1
      %s543 = scalar_select %p542, %s18, 1
      %s544 = smul.addr %s543, 2
      %s545 = smul.addr %s544, 8
      %s546 = scalar_lea.vmem %s6, %s545
      // Predicated region
      $region41: #{selection_forward.1} parent=39 // pred_check
        %p547 = pneg %p146
      $region42: #{selection_forward.1} parent=39 // pred_check_branch
        %549 = sbr.rel (%p547) target = $region44
      $region43: #{selection_forward.1} parent=39 // pred_region
        _
      $region44: #{selection_forward.1} parent=39 // pred_fallthru
        _
      // Predicated region
      $region45: #{selection_forward.1} parent=39 // pred_check
        %p550 = pneg %p172
      $region46: #{selection_forward.1} parent=39 // pred_check_branch
        %552 = sbr.rel (%p550) target = $region48
      $region47: #{selection_forward.1} parent=39 // pred_region
        _
      $region48: #{selection_forward.1} parent=39 // pred_fallthru
        _
    $region40: #{selection_forward.1} parent=5 // pred_fallthru
      _
    %p553 = scmp.le.s32.totalorder 2, %s13
    // Predicated region
    $region49: #{selection_forward.1} parent=5 // pred_check
      %p554 = pneg %p553
    $region50: #{selection_forward.1} parent=5 // pred_check_branch
      %556 = sbr.rel (%p554) target = $region52
    $region51: #{selection_forward.1} parent=5 // pred_region
      %s557 = ssub.s32 %s13, 2
      // Predicated region
      $region53: #{selection_forward.1} parent=51 // pred_check
        %p558 = pneg %p152
      $region54: #{selection_forward.1} parent=51 // pred_check_branch
        %560 = sbr.rel (%p558) target = $region56
      $region55: #{selection_forward.1} parent=51 // pred_region
        %p561 = scmp.lt.s32.totalorder %s19, 1
        %s562 = scalar_select %p561, %s19, 1
        %s563 = smul.addr %s562, 8
        %s564 = scalar_lea.vmem %s5, %s563
      $region56: #{selection_forward.1} parent=51 // pred_fallthru
        _
      // Predicated region
      $region57: #{selection_forward.1} parent=51 // pred_check
        %p565 = pneg %p178
      $region58: #{selection_forward.1} parent=51 // pred_check_branch
        %567 = sbr.rel (%p565) target = $region60
      $region59: #{selection_forward.1} parent=51 // pred_region
        %p568 = scmp.lt.s32.totalorder %s19, 1
        %s569 = scalar_select %p568, %s19, 1
        %s570 = smul.addr %s569, 2
        %s571 = smul.addr %s570, 8
        %s572 = scalar_lea.vmem %s6, %s571
      $region60: #{selection_forward.1} parent=51 // pred_fallthru
        _
    $region52: #{selection_forward.1} parent=5 // pred_fallthru
      _
  $region6: #{selection_forward.1} parent=0 // loop_footer
    %s17 = sadd.s32 1, %s13
  $region7: #{selection_forward.1} parent=0 // loop_footer_branch
    %12 = sbr.rel target = $region3
  $region8: #{selection_forward.1} parent=0 // loop_exit
    _

</llo_original>
